<compile_context>
chip_gen: v7x
topology: tpu7x:2x2x1
jax: 0.10.0
libtpu: 0.0.40
codegen_flags: <defaults>
</compile_context>

<pallas_src>
import jax
import jax.numpy as jnp
from jax.experimental import pallas as pl
from jax.experimental.pallas import tpu as pltpu

INPUT_SIZE = 4
HIDDEN_SIZE = 8
OUTPUT_SIZE = 1


def _round_up(n, m):
    return ((n + m - 1) // m) * m


def _matvec_lane(w, x):
    """w: (OUT, K) weights, x: (K, TB) activations with batch on the lane axis.

    Returns (OUT, TB). Unrolled VPU broadcast-multiply-adds — the contraction
    dims here are 4/8, far too small to be worth an MXU pass.
    """
    _, k_dim = w.shape
    acc = w[:, 0:1] * x[0:1, :]
    for k in range(1, k_dim):
        acc = acc + w[:, k : k + 1] * x[k : k + 1, :]
    return acc


def mlp_kernel(x_ref, w1_ref, b1_ref, w2_ref, b2_ref, w3_ref, b3_ref, o_ref):
    x = x_ref[...]                                                   # (4, TB)
    h1 = jnp.maximum(_matvec_lane(w1_ref[...], x) + b1_ref[...], 0.0)   # (8, TB)
    h2 = jnp.maximum(_matvec_lane(w2_ref[...], h1) + b2_ref[...], 0.0)  # (8, TB)
    out = _matvec_lane(w3_ref[...], h2) + b3_ref[...]                   # (1, TB)
    o_ref[...] = out.astype(o_ref.dtype)


def impact_prediction_forward(x, params, *, block_batch=2048):
    """x: (B, INPUT_SIZE) float32; params: dict of (out,in) weights / (out,1) biases."""
    w1, b1, w2, b2, w3, b3 = (
        params["w1"], params["b1"], params["w2"],
        params["b2"], params["w3"], params["b3"],
    )
    B = x.shape[0]

    # Lane-aligned batch tile; pad B up to a multiple of it.
    tb = min(block_batch, _round_up(B, 128))
    Bp = _round_up(B, tb)
    num_blocks = Bp // tb

    x_pad = jnp.pad(x.astype(jnp.float32), ((0, Bp - B), (0, 0)))
    x_t = x_pad.T  # (INPUT_SIZE, Bp): batch on the lane axis

    const2d = lambda shape: pl.BlockSpec(shape, lambda i: (0, 0))

    out_t = pl.pallas_call(
        mlp_kernel,
        out_shape=jax.ShapeDtypeStruct((OUTPUT_SIZE, Bp), jnp.float32),
        grid=(num_blocks,),
        in_specs=[
            pl.BlockSpec((INPUT_SIZE, tb), lambda i: (0, i)),  # streamed per tile
            const2d(w1.shape), const2d(b1.shape),              # params resident
            const2d(w2.shape), const2d(b2.shape),
            const2d(w3.shape), const2d(b3.shape),
        ],
        out_specs=pl.BlockSpec((OUTPUT_SIZE, tb), lambda i: (0, i)),
        compiler_params=pltpu.CompilerParams(
            dimension_semantics=("parallel",),
        ),
    )(x_t, w1, b1, w2, b2, w3, b3)

    return out_t[:, :B].T  # (B, OUTPUT_SIZE)


def init_params(key):
    """Deterministic synthetic parameters, PyTorch nn.Linear layout: W is (out, in)."""
    k1, k2, k3, k4, k5, k6 = jax.random.split(key, 6)
    scale = 0.1
    return {
        "w1": scale * jax.random.normal(k1, (HIDDEN_SIZE, INPUT_SIZE), jnp.float32),
        "b1": scale * jax.random.normal(k2, (HIDDEN_SIZE, 1), jnp.float32),
        "w2": scale * jax.random.normal(k3, (HIDDEN_SIZE, HIDDEN_SIZE), jnp.float32),
        "b2": scale * jax.random.normal(k4, (HIDDEN_SIZE, 1), jnp.float32),
        "w3": scale * jax.random.normal(k5, (OUTPUT_SIZE, HIDDEN_SIZE), jnp.float32),
        "b3": scale * jax.random.normal(k6, (OUTPUT_SIZE, 1), jnp.float32),
    }


def reference_forward(x, p):
    h1 = jnp.maximum(x @ p["w1"].T + p["b1"].T, 0.0)
    h2 = jnp.maximum(h1 @ p["w2"].T + p["b2"].T, 0.0)
    return h2 @ p["w3"].T + p["b3"].T


if __name__ == "__main__":
    key = jax.random.PRNGKey(0)
    kx, kp = jax.random.split(key)

    batch = 8
    x = jax.random.normal(kx, (batch, INPUT_SIZE), jnp.float32)
    params = init_params(kp)

    out = impact_prediction_forward(x, params)
    out = jax.block_until_ready(out)

    ref = reference_forward(x, params)
    assert out.shape == (batch, OUTPUT_SIZE), out.shape
    assert jnp.allclose(out, ref, atol=1e-5, rtol=1e-5)

    print("KERNEL_OK")
</pallas_src>

<mosaic_0001>
module attributes {stable_mosaic.version = 11 : i64} {
  func.func @mlp_kernel(%arg0: i32, %arg1: memref<4x128xf32, #tpu.memory_space<vmem>>, %arg2: memref<8x4xf32, #tpu.memory_space<vmem>>, %arg3: memref<8x1xf32, #tpu.memory_space<vmem>>, %arg4: memref<8x8xf32, #tpu.memory_space<vmem>>, %arg5: memref<8x1xf32, #tpu.memory_space<vmem>>, %arg6: memref<1x8xf32, #tpu.memory_space<vmem>>, %arg7: memref<1x1xf32, #tpu.memory_space<vmem>>, %arg8: memref<1x128xf32, #tpu.memory_space<vmem>>) attributes {dimension_semantics = [#tpu.dimension_semantics<parallel>], iteration_bounds = array<i64: 1>, scalar_prefetch = 0 : i64, scratch_operands = 0 : i64, tpu.core_type = #tpu.core_type<tc>, window_params = [{transform_indices = @transform_0, window_bounds = array<i64: 4, 128>}, {pipeline_mode = #tpu.pipeline_mode<synchronous>, transform_indices = @transform_1, window_bounds = array<i64: 8, 4>}, {pipeline_mode = #tpu.pipeline_mode<synchronous>, transform_indices = @transform_2, window_bounds = array<i64: 8, 1>}, {pipeline_mode = #tpu.pipeline_mode<synchronous>, transform_indices = @transform_3, window_bounds = array<i64: 8, 8>}, {pipeline_mode = #tpu.pipeline_mode<synchronous>, transform_indices = @transform_4, window_bounds = array<i64: 8, 1>}, {pipeline_mode = #tpu.pipeline_mode<synchronous>, transform_indices = @transform_5, window_bounds = array<i64: 1, 8>}, {pipeline_mode = #tpu.pipeline_mode<synchronous>, transform_indices = @transform_6, window_bounds = array<i64: 1, 1>}, {transform_indices = @transform_7, window_bounds = array<i64: 1, 128>}]} {
    %c0 = arith.constant 0 : index
    %c0_0 = arith.constant 0 : index
    %0 = vector.load %arg1[%c0, %c0_0] : memref<4x128xf32, #tpu.memory_space<vmem>>, vector<4x128xf32>
    %c0_1 = arith.constant 0 : index
    %c0_2 = arith.constant 0 : index
    %1 = vector.load %arg2[%c0_1, %c0_2] : memref<8x4xf32, #tpu.memory_space<vmem>>, vector<8x4xf32>
    %2 = vector.extract_strided_slice %1 {offsets = [0, 0], sizes = [8, 1], strides = [1, 1]} : vector<8x4xf32> to vector<8x1xf32>
    %3 = vector.extract_strided_slice %0 {offsets = [0, 0], sizes = [1, 128], strides = [1, 1]} : vector<4x128xf32> to vector<1x128xf32>
    %4 = vector.broadcast %2 : vector<8x1xf32> to vector<8x128xf32>
    %5 = vector.broadcast %3 : vector<1x128xf32> to vector<8x128xf32>
    %6 = arith.mulf %4, %5 : vector<8x128xf32>
    %7 = vector.extract_strided_slice %1 {offsets = [0, 1], sizes = [8, 1], strides = [1, 1]} : vector<8x4xf32> to vector<8x1xf32>
    %8 = vector.extract_strided_slice %0 {offsets = [1, 0], sizes = [1, 128], strides = [1, 1]} : vector<4x128xf32> to vector<1x128xf32>
    %9 = vector.broadcast %7 : vector<8x1xf32> to vector<8x128xf32>
    %10 = vector.broadcast %8 : vector<1x128xf32> to vector<8x128xf32>
    %11 = arith.mulf %9, %10 : vector<8x128xf32>
    %12 = arith.addf %6, %11 : vector<8x128xf32>
    %13 = vector.extract_strided_slice %1 {offsets = [0, 2], sizes = [8, 1], strides = [1, 1]} : vector<8x4xf32> to vector<8x1xf32>
    %14 = vector.extract_strided_slice %0 {offsets = [2, 0], sizes = [1, 128], strides = [1, 1]} : vector<4x128xf32> to vector<1x128xf32>
    %15 = vector.broadcast %13 : vector<8x1xf32> to vector<8x128xf32>
    %16 = vector.broadcast %14 : vector<1x128xf32> to vector<8x128xf32>
    %17 = arith.mulf %15, %16 : vector<8x128xf32>
    %18 = arith.addf %12, %17 : vector<8x128xf32>
    %19 = vector.extract_strided_slice %1 {offsets = [0, 3], sizes = [8, 1], strides = [1, 1]} : vector<8x4xf32> to vector<8x1xf32>
    %20 = vector.extract_strided_slice %0 {offsets = [3, 0], sizes = [1, 128], strides = [1, 1]} : vector<4x128xf32> to vector<1x128xf32>
    %21 = vector.broadcast %19 : vector<8x1xf32> to vector<8x128xf32>
    %22 = vector.broadcast %20 : vector<1x128xf32> to vector<8x128xf32>
    %23 = arith.mulf %21, %22 : vector<8x128xf32>
    %24 = arith.addf %18, %23 : vector<8x128xf32>
    %c0_3 = arith.constant 0 : index
    %c0_4 = arith.constant 0 : index
    %25 = vector.load %arg3[%c0_3, %c0_4] : memref<8x1xf32, #tpu.memory_space<vmem>>, vector<8x1xf32>
    %26 = vector.broadcast %25 : vector<8x1xf32> to vector<8x128xf32>
    %27 = arith.addf %24, %26 : vector<8x128xf32>
    %cst = arith.constant 0.000000e+00 : f32
    %28 = vector.broadcast %cst : f32 to vector<8x128xf32>
    %29 = arith.maximumf %27, %28 : vector<8x128xf32>
    %c0_5 = arith.constant 0 : index
    %c0_6 = arith.constant 0 : index
    %30 = vector.load %arg4[%c0_5, %c0_6] : memref<8x8xf32, #tpu.memory_space<vmem>>, vector<8x8xf32>
    %31 = vector.extract_strided_slice %30 {offsets = [0, 0], sizes = [8, 1], strides = [1, 1]} : vector<8x8xf32> to vector<8x1xf32>
    %32 = vector.extract_strided_slice %29 {offsets = [0, 0], sizes = [1, 128], strides = [1, 1]} : vector<8x128xf32> to vector<1x128xf32>
    %33 = vector.broadcast %31 : vector<8x1xf32> to vector<8x128xf32>
    %34 = vector.broadcast %32 : vector<1x128xf32> to vector<8x128xf32>
    %35 = arith.mulf %33, %34 : vector<8x128xf32>
    %36 = vector.extract_strided_slice %30 {offsets = [0, 1], sizes = [8, 1], strides = [1, 1]} : vector<8x8xf32> to vector<8x1xf32>
    %37 = vector.extract_strided_slice %29 {offsets = [1, 0], sizes = [1, 128], strides = [1, 1]} : vector<8x128xf32> to vector<1x128xf32>
    %38 = vector.broadcast %36 : vector<8x1xf32> to vector<8x128xf32>
    %39 = vector.broadcast %37 : vector<1x128xf32> to vector<8x128xf32>
    %40 = arith.mulf %38, %39 : vector<8x128xf32>
    %41 = arith.addf %35, %40 : vector<8x128xf32>
    %42 = vector.extract_strided_slice %30 {offsets = [0, 2], sizes = [8, 1], strides = [1, 1]} : vector<8x8xf32> to vector<8x1xf32>
    %43 = vector.extract_strided_slice %29 {offsets = [2, 0], sizes = [1, 128], strides = [1, 1]} : vector<8x128xf32> to vector<1x128xf32>
    %44 = vector.broadcast %42 : vector<8x1xf32> to vector<8x128xf32>
    %45 = vector.broadcast %43 : vector<1x128xf32> to vector<8x128xf32>
    %46 = arith.mulf %44, %45 : vector<8x128xf32>
    %47 = arith.addf %41, %46 : vector<8x128xf32>
    %48 = vector.extract_strided_slice %30 {offsets = [0, 3], sizes = [8, 1], strides = [1, 1]} : vector<8x8xf32> to vector<8x1xf32>
    %49 = vector.extract_strided_slice %29 {offsets = [3, 0], sizes = [1, 128], strides = [1, 1]} : vector<8x128xf32> to vector<1x128xf32>
    %50 = vector.broadcast %48 : vector<8x1xf32> to vector<8x128xf32>
    %51 = vector.broadcast %49 : vector<1x128xf32> to vector<8x128xf32>
    %52 = arith.mulf %50, %51 : vector<8x128xf32>
    %53 = arith.addf %47, %52 : vector<8x128xf32>
    %54 = vector.extract_strided_slice %30 {offsets = [0, 4], sizes = [8, 1], strides = [1, 1]} : vector<8x8xf32> to vector<8x1xf32>
    %55 = vector.extract_strided_slice %29 {offsets = [4, 0], sizes = [1, 128], strides = [1, 1]} : vector<8x128xf32> to vector<1x128xf32>
    %56 = vector.broadcast %54 : vector<8x1xf32> to vector<8x128xf32>
    %57 = vector.broadcast %55 : vector<1x128xf32> to vector<8x128xf32>
    %58 = arith.mulf %56, %57 : vector<8x128xf32>
    %59 = arith.addf %53, %58 : vector<8x128xf32>
    %60 = vector.extract_strided_slice %30 {offsets = [0, 5], sizes = [8, 1], strides = [1, 1]} : vector<8x8xf32> to vector<8x1xf32>
    %61 = vector.extract_strided_slice %29 {offsets = [5, 0], sizes = [1, 128], strides = [1, 1]} : vector<8x128xf32> to vector<1x128xf32>
    %62 = vector.broadcast %60 : vector<8x1xf32> to vector<8x128xf32>
    %63 = vector.broadcast %61 : vector<1x128xf32> to vector<8x128xf32>
    %64 = arith.mulf %62, %63 : vector<8x128xf32>
    %65 = arith.addf %59, %64 : vector<8x128xf32>
    %66 = vector.extract_strided_slice %30 {offsets = [0, 6], sizes = [8, 1], strides = [1, 1]} : vector<8x8xf32> to vector<8x1xf32>
    %67 = vector.extract_strided_slice %29 {offsets = [6, 0], sizes = [1, 128], strides = [1, 1]} : vector<8x128xf32> to vector<1x128xf32>
    %68 = vector.broadcast %66 : vector<8x1xf32> to vector<8x128xf32>
    %69 = vector.broadcast %67 : vector<1x128xf32> to vector<8x128xf32>
    %70 = arith.mulf %68, %69 : vector<8x128xf32>
    %71 = arith.addf %65, %70 : vector<8x128xf32>
    %72 = vector.extract_strided_slice %30 {offsets = [0, 7], sizes = [8, 1], strides = [1, 1]} : vector<8x8xf32> to vector<8x1xf32>
    %73 = vector.extract_strided_slice %29 {offsets = [7, 0], sizes = [1, 128], strides = [1, 1]} : vector<8x128xf32> to vector<1x128xf32>
    %74 = vector.broadcast %72 : vector<8x1xf32> to vector<8x128xf32>
    %75 = vector.broadcast %73 : vector<1x128xf32> to vector<8x128xf32>
    %76 = arith.mulf %74, %75 : vector<8x128xf32>
    %77 = arith.addf %71, %76 : vector<8x128xf32>
    %c0_7 = arith.constant 0 : index
    %c0_8 = arith.constant 0 : index
    %78 = vector.load %arg5[%c0_7, %c0_8] : memref<8x1xf32, #tpu.memory_space<vmem>>, vector<8x1xf32>
    %79 = vector.broadcast %78 : vector<8x1xf32> to vector<8x128xf32>
    %80 = arith.addf %77, %79 : vector<8x128xf32>
    %cst_9 = arith.constant 0.000000e+00 : f32
    %81 = vector.broadcast %cst_9 : f32 to vector<8x128xf32>
    %82 = arith.maximumf %80, %81 : vector<8x128xf32>
    %c0_10 = arith.constant 0 : index
    %c0_11 = arith.constant 0 : index
    %83 = vector.load %arg6[%c0_10, %c0_11] : memref<1x8xf32, #tpu.memory_space<vmem>>, vector<1x8xf32>
    %84 = vector.extract_strided_slice %83 {offsets = [0, 0], sizes = [1, 1], strides = [1, 1]} : vector<1x8xf32> to vector<1x1xf32>
    %85 = vector.extract_strided_slice %82 {offsets = [0, 0], sizes = [1, 128], strides = [1, 1]} : vector<8x128xf32> to vector<1x128xf32>
    %86 = vector.broadcast %84 : vector<1x1xf32> to vector<1x128xf32>
    %87 = arith.mulf %86, %85 : vector<1x128xf32>
    %88 = vector.extract_strided_slice %83 {offsets = [0, 1], sizes = [1, 1], strides = [1, 1]} : vector<1x8xf32> to vector<1x1xf32>
    %89 = vector.extract_strided_slice %82 {offsets = [1, 0], sizes = [1, 128], strides = [1, 1]} : vector<8x128xf32> to vector<1x128xf32>
    %90 = vector.broadcast %88 : vector<1x1xf32> to vector<1x128xf32>
    %91 = arith.mulf %90, %89 : vector<1x128xf32>
    %92 = arith.addf %87, %91 : vector<1x128xf32>
    %93 = vector.extract_strided_slice %83 {offsets = [0, 2], sizes = [1, 1], strides = [1, 1]} : vector<1x8xf32> to vector<1x1xf32>
    %94 = vector.extract_strided_slice %82 {offsets = [2, 0], sizes = [1, 128], strides = [1, 1]} : vector<8x128xf32> to vector<1x128xf32>
    %95 = vector.broadcast %93 : vector<1x1xf32> to vector<1x128xf32>
    %96 = arith.mulf %95, %94 : vector<1x128xf32>
    %97 = arith.addf %92, %96 : vector<1x128xf32>
    %98 = vector.extract_strided_slice %83 {offsets = [0, 3], sizes = [1, 1], strides = [1, 1]} : vector<1x8xf32> to vector<1x1xf32>
    %99 = vector.extract_strided_slice %82 {offsets = [3, 0], sizes = [1, 128], strides = [1, 1]} : vector<8x128xf32> to vector<1x128xf32>
    %100 = vector.broadcast %98 : vector<1x1xf32> to vector<1x128xf32>
    %101 = arith.mulf %100, %99 : vector<1x128xf32>
    %102 = arith.addf %97, %101 : vector<1x128xf32>
    %103 = vector.extract_strided_slice %83 {offsets = [0, 4], sizes = [1, 1], strides = [1, 1]} : vector<1x8xf32> to vector<1x1xf32>
    %104 = vector.extract_strided_slice %82 {offsets = [4, 0], sizes = [1, 128], strides = [1, 1]} : vector<8x128xf32> to vector<1x128xf32>
    %105 = vector.broadcast %103 : vector<1x1xf32> to vector<1x128xf32>
    %106 = arith.mulf %105, %104 : vector<1x128xf32>
    %107 = arith.addf %102, %106 : vector<1x128xf32>
    %108 = vector.extract_strided_slice %83 {offsets = [0, 5], sizes = [1, 1], strides = [1, 1]} : vector<1x8xf32> to vector<1x1xf32>
    %109 = vector.extract_strided_slice %82 {offsets = [5, 0], sizes = [1, 128], strides = [1, 1]} : vector<8x128xf32> to vector<1x128xf32>
    %110 = vector.broadcast %108 : vector<1x1xf32> to vector<1x128xf32>
    %111 = arith.mulf %110, %109 : vector<1x128xf32>
    %112 = arith.addf %107, %111 : vector<1x128xf32>
    %113 = vector.extract_strided_slice %83 {offsets = [0, 6], sizes = [1, 1], strides = [1, 1]} : vector<1x8xf32> to vector<1x1xf32>
    %114 = vector.extract_strided_slice %82 {offsets = [6, 0], sizes = [1, 128], strides = [1, 1]} : vector<8x128xf32> to vector<1x128xf32>
    %115 = vector.broadcast %113 : vector<1x1xf32> to vector<1x128xf32>
    %116 = arith.mulf %115, %114 : vector<1x128xf32>
    %117 = arith.addf %112, %116 : vector<1x128xf32>
    %118 = vector.extract_strided_slice %83 {offsets = [0, 7], sizes = [1, 1], strides = [1, 1]} : vector<1x8xf32> to vector<1x1xf32>
    %119 = vector.extract_strided_slice %82 {offsets = [7, 0], sizes = [1, 128], strides = [1, 1]} : vector<8x128xf32> to vector<1x128xf32>
    %120 = vector.broadcast %118 : vector<1x1xf32> to vector<1x128xf32>
    %121 = arith.mulf %120, %119 : vector<1x128xf32>
    %122 = arith.addf %117, %121 : vector<1x128xf32>
    %c0_12 = arith.constant 0 : index
    %c0_13 = arith.constant 0 : index
    %123 = vector.load %arg7[%c0_12, %c0_13] : memref<1x1xf32, #tpu.memory_space<vmem>>, vector<1x1xf32>
    %124 = vector.broadcast %123 : vector<1x1xf32> to vector<1x128xf32>
    %125 = arith.addf %122, %124 : vector<1x128xf32>
    %c0_14 = arith.constant 0 : index
    %c0_15 = arith.constant 0 : index
    %126 = vector.load %arg8[%c0_14, %c0_15] : memref<1x128xf32, #tpu.memory_space<vmem>>, vector<1x128xf32>
    tpu.vector_store %arg8[%c0_14, %c0_15], %125 {strides = array<i32>} : memref<1x128xf32, #tpu.memory_space<vmem>>, vector<1x128xf32>,
    return
  }
  func.func @transform_0(%arg0: i32) -> (i32, i32) {
    %c0_i32 = arith.constant 0 : i32
    %c0_i32_0 = arith.constant 0 : i32
    return %c0_i32, %arg0 : i32, i32
  }
  func.func @transform_1(%arg0: i32) -> (i32, i32) {
    %c0_i32 = arith.constant 0 : i32
    %c0_i32_0 = arith.constant 0 : i32
    %c0_i32_1 = arith.constant 0 : i32
    return %c0_i32, %c0_i32_0 : i32, i32
  }
  func.func @transform_2(%arg0: i32) -> (i32, i32) {
    %c0_i32 = arith.constant 0 : i32
    %c0_i32_0 = arith.constant 0 : i32
    %c0_i32_1 = arith.constant 0 : i32
    return %c0_i32, %c0_i32_0 : i32, i32
  }
  func.func @transform_3(%arg0: i32) -> (i32, i32) {
    %c0_i32 = arith.constant 0 : i32
    %c0_i32_0 = arith.constant 0 : i32
    %c0_i32_1 = arith.constant 0 : i32
    return %c0_i32, %c0_i32_0 : i32, i32
  }
  func.func @transform_4(%arg0: i32) -> (i32, i32) {
    %c0_i32 = arith.constant 0 : i32
    %c0_i32_0 = arith.constant 0 : i32
    %c0_i32_1 = arith.constant 0 : i32
    return %c0_i32, %c0_i32_0 : i32, i32
  }
  func.func @transform_5(%arg0: i32) -> (i32, i32) {
    %c0_i32 = arith.constant 0 : i32
    %c0_i32_0 = arith.constant 0 : i32
    %c0_i32_1 = arith.constant 0 : i32
    return %c0_i32, %c0_i32_0 : i32, i32
  }
  func.func @transform_6(%arg0: i32) -> (i32, i32) {
    %c0_i32 = arith.constant 0 : i32
    %c0_i32_0 = arith.constant 0 : i32
    %c0_i32_1 = arith.constant 0 : i32
    return %c0_i32, %c0_i32_0 : i32, i32
  }
  func.func @transform_7(%arg0: i32) -> (i32, i32) {
    %c0_i32 = arith.constant 0 : i32
    %c0_i32_0 = arith.constant 0 : i32
    return %c0_i32, %arg0 : i32, i32
  }
}

</mosaic_0001>

<llo_original>
// kernel: tpu_custom_call.1
$region0: #{tpu_custom_call.1}
  #allocation0 [shape = 'u32[]', space=smem, size = 0x4, offset = 0x4, fixed_abs, tag = 'smem constant byte address 0x4 - core index']
  #allocation1 [shape = 'u32[144,128]{1,0:T(1,128)}', space=vmem, size = 0x12000, scoped, tag = 'internal scratch']
  #allocation2 [shape = 'f32[1,1]{1,0:T(1,128)S(1)}', space=vmem, size = 0x200, scoped, tag = 'scoped memory for tpu_custom_call.1']
  %s0 = inlined_call_operand.vmem [shape: f32[4,128], index: 0, kind: input, shape index: {}]
  %s1 = inlined_call_operand.vmem [shape: f32[8,4], index: 1, kind: input, shape index: {}]
  %s2 = inlined_call_operand.vmem [shape: f32[8,1], index: 2, kind: input, shape index: {}]
  %s3 = inlined_call_operand.vmem [shape: f32[8,8], index: 3, kind: input, shape index: {}]
  %s4 = inlined_call_operand.vmem [shape: f32[8,1], index: 4, kind: input, shape index: {}]
  %s5 = inlined_call_operand.vmem [shape: f32[1,8], index: 5, kind: input, shape index: {}]
  %s6 = inlined_call_operand.<no memory space> [shape: f32[1,1], index: 6, kind: input, shape index: {}]
  %s7 = inlined_call_operand.hbm [shape: f32[1,128], index: 7, kind: output, shape index: {}]
  %s8 = sld [smem:[#allocation0]]
  $region38: #{tpu_custom_call.1} parent=0
    _
  %s10 = ssub.s32 1, %s8
  %s11 = scalar_select 0, %s10, %s8
  %v12 = vstv %s6
  %13 = vst [vmem:[#allocation2] sm:$0x1] %v12
  $region1: #{tpu_custom_call.1} parent=0
    #allocation3 [shape = 'u8[512]{0}', space=vmem, size = 0x400, scoped, tag = 'output window, operand 0, single buffered']
    #allocation4 [shape = 's32[1]{0}', space=sflag, size = 0x4, scoped, tag = 'scoped memory for tpu_custom_call.1']
    %14 = vsyncpa [#allocation4], 0
    // Predicated region
    $region2: #{tpu_custom_call.1} parent=1 // pred_check
      _
    $region3: #{tpu_custom_call.1} parent=1 // pred_check_branch
      %16 = sbr.rel (0) target = $region5
    $region4: #{tpu_custom_call.1} parent=1 // pred_region
      _
    $region5: #{tpu_custom_call.1} parent=1 // pred_fallthru
      _
    // Predicated region
    $region6: #{tpu_custom_call.1} parent=1 // pred_check
      _
    $region7: #{tpu_custom_call.1} parent=1 // pred_check_branch
      %18 = sbr.rel (0) target = $region9
    $region8: #{tpu_custom_call.1} parent=1 // pred_region
      _
    $region9: #{tpu_custom_call.1} parent=1 // pred_fallthru
      _
    // Predicated region
    $region10: #{tpu_custom_call.1} parent=1 // pred_check
      _
    $region11: #{tpu_custom_call.1} parent=1 // pred_check_branch
      %20 = sbr.rel (0) target = $region13
    $region12: #{tpu_custom_call.1} parent=1 // pred_region
      _
    $region13: #{tpu_custom_call.1} parent=1 // pred_fallthru
      _
    // Predicated region
    $region14: #{tpu_custom_call.1} parent=1 // pred_check
      _
    $region15: #{tpu_custom_call.1} parent=1 // pred_check_branch
      %22 = sbr.rel (0) target = $region17
    $region16: #{tpu_custom_call.1} parent=1 // pred_region
      _
    $region17: #{tpu_custom_call.1} parent=1 // pred_fallthru
      _
    // Predicated region
    $region18: #{tpu_custom_call.1} parent=1 // pred_check
      _
    $region19: #{tpu_custom_call.1} parent=1 // pred_check_branch
      %24 = sbr.rel (0) target = $region21
    $region20: #{tpu_custom_call.1} parent=1 // pred_region
      _
    $region21: #{tpu_custom_call.1} parent=1 // pred_fallthru
      _
    // Predicated region
    $region22: #{tpu_custom_call.1} parent=1 // pred_check
      _
    $region23: #{tpu_custom_call.1} parent=1 // pred_check_branch
      %26 = sbr.rel (0) target = $region25
    $region24: #{tpu_custom_call.1} parent=1 // pred_region
      _
    $region25: #{tpu_custom_call.1} parent=1 // pred_fallthru
      _
    // Predicated region
    $region26: #{tpu_custom_call.1} parent=1 // pred_check
      _
    $region27: #{tpu_custom_call.1} parent=1 // pred_check_branch
      %28 = sbr.rel (0) target = $region29
    $region28: #{tpu_custom_call.1} parent=1 // pred_region
      _
    $region29: #{tpu_custom_call.1} parent=1 // pred_fallthru
      _
    %v29 = vld [vmem:[%s0] sm:$0xf]
    %v30 = vld [vmem:[%s1] sm:$0xff]
    %32 = vset.pattern.permute.xlu0 0
    %33 = vperm.xlu0 %32, %v30
    %v34 = vpop.permute.xlu0 %33
    %v36 = vlaneseq
    %v37 = vshrl.u32 %v36, 7
    %v38 = vsub.s32 0, %v37
    %v39 = vrot.slane %v29, %v38
    %v40 = vmul.f32 %v34, %v39
    %41 = vset.pattern.permute.xlu0 1
    %42 = vperm.xlu0 %41, %v30
    %v43 = vpop.permute.xlu0 %42
    %v45 = vlaneseq
    %v46 = vshrl.u32 %v45, 7
    %v47 = vsub.s32 1, %v46
    %v48 = vrot.slane %v29, %v47
    %v49 = vmul.f32 %v43, %v48
    %v50 = vadd.f32 %v40, %v49
    %51 = vset.pattern.permute.xlu0 2
    %52 = vperm.xlu0 %51, %v30
    %v53 = vpop.permute.xlu0 %52
    %v55 = vlaneseq
    %v56 = vshrl.u32 %v55, 7
    %v57 = vsub.s32 2, %v56
    %v58 = vrot.slane %v29, %v57
    %v59 = vmul.f32 %v53, %v58
    %v60 = vadd.f32 %v50, %v59
    %61 = vset.pattern.permute.xlu0 3
    %62 = vperm.xlu0 %61, %v30
    %v63 = vpop.permute.xlu0 %62
    %v65 = vlaneseq
    %v66 = vshrl.u32 %v65, 7
    %v67 = vsub.s32 3, %v66
    %v68 = vrot.slane %v29, %v67
    %v69 = vmul.f32 %v63, %v68
    %v70 = vadd.f32 %v60, %v69
    %v71 = vld [vmem:[%s2] sm:$0xff]
    %73 = vset.pattern.permute.xlu0 0
    %74 = vperm.xlu0 %73, %v71
    %v75 = vpop.permute.xlu0 %74
    %v77 = vadd.f32 %v70, %v75
    %v78 = vmax.f32 %v77, 0.0
    %v79 = vld [vmem:[%s3] sm:$0xff]
    %81 = vset.pattern.permute.xlu0 0
    %82 = vperm.xlu0 %81, %v79
    %v83 = vpop.permute.xlu0 %82
    %v85 = vlaneseq
    %v86 = vshrl.u32 %v85, 7
    %v87 = vsub.s32 0, %v86
    %v88 = vrot.slane %v78, %v87
    %v89 = vmul.f32 %v83, %v88
    %90 = vset.pattern.permute.xlu0 1
    %91 = vperm.xlu0 %90, %v79
    %v92 = vpop.permute.xlu0 %91
    %v94 = vlaneseq
    %v95 = vshrl.u32 %v94, 7
    %v96 = vsub.s32 1, %v95
    %v97 = vrot.slane %v78, %v96
    %v98 = vmul.f32 %v92, %v97
    %v99 = vadd.f32 %v89, %v98
    %100 = vset.pattern.permute.xlu0 2
    %101 = vperm.xlu0 %100, %v79
    %v102 = vpop.permute.xlu0 %101
    %v104 = vlaneseq
    %v105 = vshrl.u32 %v104, 7
    %v106 = vsub.s32 2, %v105
    %v107 = vrot.slane %v78, %v106
    %v108 = vmul.f32 %v102, %v107
    %v109 = vadd.f32 %v99, %v108
    %110 = vset.pattern.permute.xlu0 3
    %111 = vperm.xlu0 %110, %v79
    %v112 = vpop.permute.xlu0 %111
    %v114 = vlaneseq
    %v115 = vshrl.u32 %v114, 7
    %v116 = vsub.s32 3, %v115
    %v117 = vrot.slane %v78, %v116
    %v118 = vmul.f32 %v112, %v117
    %v119 = vadd.f32 %v109, %v118
    %120 = vset.pattern.permute.xlu0 4
    %121 = vperm.xlu0 %120, %v79
    %v122 = vpop.permute.xlu0 %121
    %v124 = vlaneseq
    %v125 = vshrl.u32 %v124, 7
    %v126 = vsub.s32 4, %v125
    %v127 = vrot.slane %v78, %v126
    %v128 = vmul.f32 %v122, %v127
    %v129 = vadd.f32 %v119, %v128
    %130 = vset.pattern.permute.xlu0 5
    %131 = vperm.xlu0 %130, %v79
    %v132 = vpop.permute.xlu0 %131
    %v134 = vlaneseq
    %v135 = vshrl.u32 %v134, 7
    %v136 = vsub.s32 5, %v135
    %v137 = vrot.slane %v78, %v136
    %v138 = vmul.f32 %v132, %v137
    %v139 = vadd.f32 %v129, %v138
    %140 = vset.pattern.permute.xlu0 6
    %141 = vperm.xlu0 %140, %v79
    %v142 = vpop.permute.xlu0 %141
    %v144 = vlaneseq
    %v145 = vshrl.u32 %v144, 7
    %v146 = vsub.s32 6, %v145
    %v147 = vrot.slane %v78, %v146
    %v148 = vmul.f32 %v142, %v147
    %v149 = vadd.f32 %v139, %v148
    %150 = vset.pattern.permute.xlu0 7
    %151 = vperm.xlu0 %150, %v79
    %v152 = vpop.permute.xlu0 %151
    %v154 = vlaneseq
    %v155 = vshrl.u32 %v154, 7
    %v156 = vsub.s32 7, %v155
    %v157 = vrot.slane %v78, %v156
    %v158 = vmul.f32 %v152, %v157
    %v159 = vadd.f32 %v149, %v158
    %v160 = vld [vmem:[%s4] sm:$0xff]
    %162 = vset.pattern.permute.xlu0 0
    %163 = vperm.xlu0 %162, %v160
    %v164 = vpop.permute.xlu0 %163
    %v166 = vadd.f32 %v159, %v164
    %v167 = vmax.f32 %v166, 0.0
    %v168 = vld [vmem:[%s5] sm:$0x1]
    %170 = vset.pattern.permute.xlu0 0
    %171 = vperm.xlu0 %170, %v168
    %v172 = vpop.permute.xlu0 %171
    %v174 = vlaneseq
    %v175 = vshrl.u32 %v174, 7
    %v176 = vsub.s32 0, %v175
    %v177 = vrot.slane %v172, %v176
    %v178 = vmul.f32 %v177, %v167
    %179 = vset.pattern.permute.xlu0 1
    %180 = vperm.xlu0 %179, %v168
    %v181 = vpop.permute.xlu0 %180
    %v183 = vlaneseq
    %v184 = vshrl.u32 %v183, 7
    %v185 = vsub.s32 0, %v184
    %v186 = vrot.slane %v181, %v185
    %v187 = vmul.f32 %v186, %v167
    %v189 = vrot.slane %v187, 1
    %v191 = vadd.f32 %v178, %v189
    %192 = vset.pattern.permute.xlu0 2
    %193 = vperm.xlu0 %192, %v168
    %v194 = vpop.permute.xlu0 %193
    %v196 = vlaneseq
    %v197 = vshrl.u32 %v196, 7
    %v198 = vsub.s32 0, %v197
    %v199 = vrot.slane %v194, %v198
    %v200 = vmul.f32 %v199, %v167
    %v202 = vrot.slane %v200, 2
    %v204 = vadd.f32 %v191, %v202
    %205 = vset.pattern.permute.xlu0 3
    %206 = vperm.xlu0 %205, %v168
    %v207 = vpop.permute.xlu0 %206
    %v209 = vlaneseq
    %v210 = vshrl.u32 %v209, 7
    %v211 = vsub.s32 0, %v210
    %v212 = vrot.slane %v207, %v211
    %v213 = vmul.f32 %v212, %v167
    %v215 = vrot.slane %v213, 3
    %v217 = vadd.f32 %v204, %v215
    %218 = vset.pattern.permute.xlu0 4
    %219 = vperm.xlu0 %218, %v168
    %v220 = vpop.permute.xlu0 %219
    %v222 = vlaneseq
    %v223 = vshrl.u32 %v222, 7
    %v224 = vsub.s32 0, %v223
    %v225 = vrot.slane %v220, %v224
    %v226 = vmul.f32 %v225, %v167
    %v228 = vrot.slane %v226, 4
    %v230 = vadd.f32 %v217, %v228
    %231 = vset.pattern.permute.xlu0 5
    %232 = vperm.xlu0 %231, %v168
    %v233 = vpop.permute.xlu0 %232
    %v235 = vlaneseq
    %v236 = vshrl.u32 %v235, 7
    %v237 = vsub.s32 0, %v236
    %v238 = vrot.slane %v233, %v237
    %v239 = vmul.f32 %v238, %v167
    %v241 = vrot.slane %v239, 5
    %v243 = vadd.f32 %v230, %v241
    %244 = vset.pattern.permute.xlu0 6
    %245 = vperm.xlu0 %244, %v168
    %v246 = vpop.permute.xlu0 %245
    %v248 = vlaneseq
    %v249 = vshrl.u32 %v248, 7
    %v250 = vsub.s32 0, %v249
    %v251 = vrot.slane %v246, %v250
    %v252 = vmul.f32 %v251, %v167
    %v254 = vrot.slane %v252, 6
    %v256 = vadd.f32 %v243, %v254
    %257 = vset.pattern.permute.xlu0 7
    %258 = vperm.xlu0 %257, %v168
    %v259 = vpop.permute.xlu0 %258
    %v261 = vlaneseq
    %v262 = vshrl.u32 %v261, 7
    %v263 = vsub.s32 0, %v262
    %v264 = vrot.slane %v259, %v263
    %v265 = vmul.f32 %v264, %v167
    %v267 = vrot.slane %v265, 7
    %v269 = vadd.f32 %v256, %v267
    %v270 = vld [vmem:[#allocation2] sm:$0x1]
    %272 = vset.pattern.permute.xlu0 0
    %273 = vperm.xlu0 %272, %v270
    %v274 = vpop.permute.xlu0 %273
    %v276 = vlaneseq
    %v277 = vshrl.u32 %v276, 7
    %v278 = vsub.s32 0, %v277
    %v279 = vrot.slane %v274, %v278
    %v280 = vadd.f32 %v269, %v279
    %281 = vst [vmem:[#allocation3] sm:$0x1] %v280
    // Predicated region
    $region30: #{tpu_custom_call.1} parent=1 // pred_check
      _
    $region31: #{tpu_custom_call.1} parent=1 // pred_check_branch
      %283 = sbr.rel (0) target = $region33
    $region32: #{tpu_custom_call.1} parent=1 // pred_region
      %s285 = ssub.s32 16, 16
      %286 = vsyncadd [#allocation4], %s285
      %s288 = sshll.u32 [#allocation3], 4
      %s289 = int_to_ptr.vmem [resolvable:$true] %s288
      %291 = dma.vmem_to_hbm [thread:$0]  %s289, 16, %s7, [#allocation4]
    $region33: #{tpu_custom_call.1} parent=1 // pred_fallthru
      _
    // Predicated region
    $region34: #{tpu_custom_call.1} parent=1 // pred_check
      _
    $region35: #{tpu_custom_call.1} parent=1 // pred_check_branch
      %293 = sbr.rel (0) target = $region37
    $region36: #{tpu_custom_call.1} parent=1 // pred_region
      %294 = dma.done [#allocation4], 16
    $region37: #{tpu_custom_call.1} parent=1 // pred_fallthru
      _
    %295 = vsyncpa [#allocation4], 1

</llo_original>
